<compile_context>
chip_gen: v6e
topology: v6e:2x2x1
jax: 0.10.0
libtpu: 0.0.40
codegen_flags: <defaults>
</compile_context>

<pallas_src>
import functools

import jax
import jax.numpy as jnp
from jax.experimental import pallas as pl
from jax.experimental.pallas import tpu as pltpu

LN_EPS = 1e-5  # matches nn.LayerNorm default


def _round_up(x, m):
    return ((x + m - 1) // m) * m


# ---------------------------------------------------------------------------
# Fused kernel factory (layer count / sizes are static -> Python loop unrolls)
# ---------------------------------------------------------------------------
def _make_fused_kernel(hidden_dims, hidden_pads):
    """hidden_dims: real hidden sizes (for LN statistics); hidden_pads: lane-padded sizes."""

    def kernel(*refs):
        x_ref, o_ref = refs[0], refs[-1]
        p = refs[1:-1]

        # Running activation: stays in f32, never written to HBM between layers.
        h = x_ref[...].astype(jnp.float32)

        idx = 0
        for H, Hp in zip(hidden_dims, hidden_pads):
            w_ref, b_ref, g_ref, beta_ref = p[idx], p[idx + 1], p[idx + 2], p[idx + 3]
            idx += 4

            y = jnp.dot(h, w_ref[...], preferred_element_type=jnp.float32)  # MXU
            y = jnp.maximum(y + b_ref[...], 0.0)                            # bias + ReLU

            # LayerNorm over the real H lanes. Padded lanes of y are exactly 0
            # (zero weight cols / zero bias + ReLU), so the unmasked lane-sum
            # already equals the real-lane sum; only the variance needs a mask.
            mean = jnp.sum(y, axis=-1, keepdims=True) * (1.0 / H)
            if Hp == H:
                var = jnp.mean(jnp.square(y - mean), axis=-1, keepdims=True)
            else:
                lane = jax.lax.broadcasted_iota(jnp.int32, y.shape, 1)
                d = jnp.where(lane < H, y - mean, 0.0)
                var = jnp.sum(jnp.square(d), axis=-1, keepdims=True) * (1.0 / H)
            inv_std = jax.lax.rsqrt(var + LN_EPS)                           # EUP

            # gamma/beta are zero-padded -> padded lanes come out exactly 0 again.
            h = (y - mean) * inv_std * g_ref[...] + beta_ref[...]

        w_ref, b_ref = p[idx], p[idx + 1]
        y = jnp.dot(h, w_ref[...], preferred_element_type=jnp.float32) + b_ref[...]
        o_ref[...] = y.astype(o_ref.dtype)                                  # single lane-dense store

    return kernel


# ---------------------------------------------------------------------------
# Forward wrapper: pads to lane/sublane-friendly shapes, builds one pallas_call
# ---------------------------------------------------------------------------
@functools.partial(jax.jit, static_argnames=("batch_tile",))
def policy_network_forward(x, params, batch_tile=128):
    B, D = x.shape
    hidden = params["hidden"]
    w_f, b_f = params["final"]

    hidden_dims = [w.shape[1] for (w, _, _, _) in hidden]
    out_dim = w_f.shape[1]

    Dp = _round_up(D, 128)
    hidden_pads = [_round_up(h, 128) for h in hidden_dims]
    Op = _round_up(out_dim, 128)

    # Batch tile: multiple of 8 sublanes, capped at batch_tile; pad batch to a tile multiple.
    TB = max(8, _round_up(min(batch_tile, _round_up(B, 8)), 8))
    Bp = _round_up(B, TB)

    xp = jnp.pad(x, ((0, Bp - B), (0, Dp - D)))

    inputs = [xp]
    in_specs = [pl.BlockSpec((TB, Dp), lambda i: (i, 0))]

    prev_p, prev_r = Dp, D
    for (w, b, g, beta), H, Hp in zip(hidden, hidden_dims, hidden_pads):
        wp = jnp.pad(w, ((0, prev_p - prev_r), (0, Hp - H)))
        bp = jnp.pad(b.reshape(1, -1), ((0, 0), (0, Hp - H)))
        gp = jnp.pad(g.reshape(1, -1), ((0, 0), (0, Hp - H)))      # zero-pad gamma
        betap = jnp.pad(beta.reshape(1, -1), ((0, 0), (0, Hp - H)))
        inputs += [wp, bp, gp, betap]
        in_specs += [
            pl.BlockSpec((prev_p, Hp), lambda i: (0, 0)),          # weights resident across grid
            pl.BlockSpec((1, Hp), lambda i: (0, 0)),
            pl.BlockSpec((1, Hp), lambda i: (0, 0)),
            pl.BlockSpec((1, Hp), lambda i: (0, 0)),
        ]
        prev_p, prev_r = Hp, H

    wfp = jnp.pad(w_f, ((0, prev_p - prev_r), (0, Op - out_dim)))
    bfp = jnp.pad(b_f.reshape(1, -1), ((0, 0), (0, Op - out_dim)))
    inputs += [wfp, bfp]
    in_specs += [
        pl.BlockSpec((prev_p, Op), lambda i: (0, 0)),
        pl.BlockSpec((1, Op), lambda i: (0, 0)),
    ]

    kernel = _make_fused_kernel(tuple(hidden_dims), tuple(hidden_pads))

    out_padded = pl.pallas_call(
        kernel,
        out_shape=jax.ShapeDtypeStruct((Bp, Op), x.dtype),
        grid=(Bp // TB,),
        in_specs=in_specs,
        out_specs=pl.BlockSpec((TB, Op), lambda i: (i, 0)),
        compiler_params=pltpu.CompilerParams(
            dimension_semantics=("parallel",),  # shard batch tiles across TCs on v7x
        ),
    )(*inputs)

    return out_padded[:B, :out_dim]


# ---------------------------------------------------------------------------
# Parameter init (deterministic, PyTorch nn.Linear / nn.LayerNorm style)
# ---------------------------------------------------------------------------
def init_policy_params(key, input_dim, output_dim, hidden_dims):
    params = {"hidden": [], "final": None}
    prev_dim = input_dim
    for h in hidden_dims:
        key, kw, kb = jax.random.split(key, 3)
        bound = 1.0 / float(prev_dim) ** 0.5
        w = jax.random.uniform(kw, (prev_dim, h), jnp.float32, -bound, bound)
        b = jax.random.uniform(kb, (1, h), jnp.float32, -bound, bound)
        gamma = jnp.ones((1, h), jnp.float32)
        beta = jnp.zeros((1, h), jnp.float32)
        params["hidden"].append((w, b, gamma, beta))
        prev_dim = h
    key, kw, kb = jax.random.split(key, 3)
    bound = 1.0 / float(prev_dim) ** 0.5
    w = jax.random.uniform(kw, (prev_dim, output_dim), jnp.float32, -bound, bound)
    b = jax.random.uniform(kb, (1, output_dim), jnp.float32, -bound, bound)
    params["final"] = (w, b)
    return params


# ---------------------------------------------------------------------------
# Pure-JAX reference (unpadded) for the correctness check
# ---------------------------------------------------------------------------
def reference_forward(x, params):
    h = x
    for (w, b, g, beta) in params["hidden"]:
        y = h @ w + b
        y = jnp.maximum(y, 0.0)
        mean = jnp.mean(y, axis=-1, keepdims=True)
        var = jnp.mean(jnp.square(y - mean), axis=-1, keepdims=True)
        h = (y - mean) / jnp.sqrt(var + LN_EPS) * g + beta
    w, b = params["final"]
    return h @ w + b


if __name__ == "__main__":
    # Small shapes consistent with PolicyNetwork(input_dim, output_dim, hidden_dims);
    # batch=10 exercises both the batch-tile padding and the lane padding paths.
    batch = 10
    input_dim = 32
    output_dim = 8
    hidden_dims = [32, 32]

    key = jax.random.PRNGKey(0)
    key, kx = jax.random.split(key)
    x = jax.random.normal(kx, (batch, input_dim), jnp.float32)

    params = init_policy_params(key, input_dim, output_dim, hidden_dims)

    out = policy_network_forward(x, params)
    out = jax.block_until_ready(out)

    ref = reference_forward(x, params)
    assert out.shape == (batch, output_dim), out.shape
    assert jnp.allclose(out, ref, atol=1e-4, rtol=1e-4), float(jnp.max(jnp.abs(out - ref)))

    print("KERNEL_OK")
</pallas_src>

<mosaic_0001>
module attributes {stable_mosaic.version = 11 : i64} {
  func.func @kernel(%arg0: i32, %arg1: memref<16x128xf32, #tpu.memory_space<vmem>>, %arg2: memref<128x128xf32, #tpu.memory_space<vmem>>, %arg3: memref<1x128xf32, #tpu.memory_space<vmem>>, %arg4: memref<1x128xf32, #tpu.memory_space<vmem>>, %arg5: memref<1x128xf32, #tpu.memory_space<vmem>>, %arg6: memref<128x128xf32, #tpu.memory_space<vmem>>, %arg7: memref<1x128xf32, #tpu.memory_space<vmem>>, %arg8: memref<1x128xf32, #tpu.memory_space<vmem>>, %arg9: memref<1x128xf32, #tpu.memory_space<vmem>>, %arg10: memref<128x128xf32, #tpu.memory_space<vmem>>, %arg11: memref<1x128xf32, #tpu.memory_space<vmem>>, %arg12: memref<16x128xf32, #tpu.memory_space<vmem>>) attributes {dimension_semantics = [#tpu.dimension_semantics<parallel>], iteration_bounds = array<i64: 1>, scalar_prefetch = 0 : i64, scratch_operands = 0 : i64, tpu.core_type = #tpu.core_type<tc>, window_params = [{transform_indices = @transform_0, window_bounds = array<i64: 16, 128>}, {pipeline_mode = #tpu.pipeline_mode<synchronous>, transform_indices = @transform_1, window_bounds = array<i64: 128, 128>}, {pipeline_mode = #tpu.pipeline_mode<synchronous>, transform_indices = @transform_2, window_bounds = array<i64: 1, 128>}, {pipeline_mode = #tpu.pipeline_mode<synchronous>, transform_indices = @transform_3, window_bounds = array<i64: 1, 128>}, {pipeline_mode = #tpu.pipeline_mode<synchronous>, transform_indices = @transform_4, window_bounds = array<i64: 1, 128>}, {pipeline_mode = #tpu.pipeline_mode<synchronous>, transform_indices = @transform_5, window_bounds = array<i64: 128, 128>}, {pipeline_mode = #tpu.pipeline_mode<synchronous>, transform_indices = @transform_6, window_bounds = array<i64: 1, 128>}, {pipeline_mode = #tpu.pipeline_mode<synchronous>, transform_indices = @transform_7, window_bounds = array<i64: 1, 128>}, {pipeline_mode = #tpu.pipeline_mode<synchronous>, transform_indices = @transform_8, window_bounds = array<i64: 1, 128>}, {pipeline_mode = #tpu.pipeline_mode<synchronous>, transform_indices = @transform_9, window_bounds = array<i64: 128, 128>}, {pipeline_mode = #tpu.pipeline_mode<synchronous>, transform_indices = @transform_10, window_bounds = array<i64: 1, 128>}, {transform_indices = @transform_11, window_bounds = array<i64: 16, 128>}]} {
    %c0 = arith.constant 0 : index
    %c0_0 = arith.constant 0 : index
    %0 = vector.load %arg1[%c0, %c0_0] : memref<16x128xf32, #tpu.memory_space<vmem>>, vector<16x128xf32>
    %c0_1 = arith.constant 0 : index
    %c0_2 = arith.constant 0 : index
    %1 = vector.load %arg2[%c0_1, %c0_2] : memref<128x128xf32, #tpu.memory_space<vmem>>, vector<128x128xf32>
    %cst = arith.constant dense<0.000000e+00> : vector<16x128xf32>
    %2 = tpu.matmul %0, %1, %cst {dimension_numbers = #tpu.dot_dimension_numbers<[1], [0], [0], [1], [0, 0, 1, 1], [], []>} : vector<16x128xf32>, vector<128x128xf32>, vector<16x128xf32> -> vector<16x128xf32>
    %c0_3 = arith.constant 0 : index
    %c0_4 = arith.constant 0 : index
    %3 = vector.load %arg3[%c0_3, %c0_4] : memref<1x128xf32, #tpu.memory_space<vmem>>, vector<1x128xf32>
    %4 = vector.broadcast %3 : vector<1x128xf32> to vector<16x128xf32>
    %5 = arith.addf %2, %4 : vector<16x128xf32>
    %cst_5 = arith.constant 0.000000e+00 : f32
    %6 = vector.broadcast %cst_5 : f32 to vector<16x128xf32>
    %7 = arith.maximumf %5, %6 : vector<16x128xf32>
    %cst_6 = arith.constant dense<0.000000e+00> : vector<16xf32>
    %8 = vector.multi_reduction <add>, %7, %cst_6 [1] : vector<16x128xf32> to vector<16xf32>
    %9 = vector.shape_cast %8 : vector<16xf32> to vector<16x1xf32>
    %cst_7 = arith.constant 3.125000e-02 : f32
    %10 = vector.broadcast %cst_7 : f32 to vector<16x1xf32>
    %11 = arith.mulf %9, %10 : vector<16x1xf32>
    %12 = tpu.iota {dimensions = array<i32: 1>} : vector<16x128xi32>
    %c32_i32 = arith.constant 32 : i32
    %13 = vector.broadcast %c32_i32 : i32 to vector<16x128xi32>
    %14 = arith.cmpi slt, %12, %13 : vector<16x128xi32>
    %15 = vector.broadcast %11 : vector<16x1xf32> to vector<16x128xf32>
    %16 = arith.subf %7, %15 : vector<16x128xf32>
    %cst_8 = arith.constant 0.000000e+00 : f32
    %17 = vector.broadcast %cst_8 : f32 to vector<16x128xf32>
    %18 = arith.select %14, %16, %17 : vector<16x128xi1>, vector<16x128xf32>
    %19 = arith.mulf %18, %18 : vector<16x128xf32>
    %cst_9 = arith.constant dense<0.000000e+00> : vector<16xf32>
    %20 = vector.multi_reduction <add>, %19, %cst_9 [1] : vector<16x128xf32> to vector<16xf32>
    %21 = vector.shape_cast %20 : vector<16xf32> to vector<16x1xf32>
    %cst_10 = arith.constant 3.125000e-02 : f32
    %22 = vector.broadcast %cst_10 : f32 to vector<16x1xf32>
    %23 = arith.mulf %21, %22 : vector<16x1xf32>
    %cst_11 = arith.constant 9.99999974E-6 : f32
    %24 = vector.broadcast %cst_11 : f32 to vector<16x1xf32>
    %25 = arith.addf %23, %24 : vector<16x1xf32>
    %26 = math.rsqrt %25 : vector<16x1xf32>
    %27 = vector.broadcast %11 : vector<16x1xf32> to vector<16x128xf32>
    %28 = arith.subf %7, %27 : vector<16x128xf32>
    %29 = vector.broadcast %26 : vector<16x1xf32> to vector<16x128xf32>
    %30 = arith.mulf %28, %29 : vector<16x128xf32>
    %c0_12 = arith.constant 0 : index
    %c0_13 = arith.constant 0 : index
    %31 = vector.load %arg4[%c0_12, %c0_13] : memref<1x128xf32, #tpu.memory_space<vmem>>, vector<1x128xf32>
    %32 = vector.broadcast %31 : vector<1x128xf32> to vector<16x128xf32>
    %33 = arith.mulf %30, %32 : vector<16x128xf32>
    %c0_14 = arith.constant 0 : index
    %c0_15 = arith.constant 0 : index
    %34 = vector.load %arg5[%c0_14, %c0_15] : memref<1x128xf32, #tpu.memory_space<vmem>>, vector<1x128xf32>
    %35 = vector.broadcast %34 : vector<1x128xf32> to vector<16x128xf32>
    %36 = arith.addf %33, %35 : vector<16x128xf32>
    %c0_16 = arith.constant 0 : index
    %c0_17 = arith.constant 0 : index
    %37 = vector.load %arg6[%c0_16, %c0_17] : memref<128x128xf32, #tpu.memory_space<vmem>>, vector<128x128xf32>
    %cst_18 = arith.constant dense<0.000000e+00> : vector<16x128xf32>
    %38 = tpu.matmul %36, %37, %cst_18 {dimension_numbers = #tpu.dot_dimension_numbers<[1], [0], [0], [1], [0, 0, 1, 1], [], []>} : vector<16x128xf32>, vector<128x128xf32>, vector<16x128xf32> -> vector<16x128xf32>
    %c0_19 = arith.constant 0 : index
    %c0_20 = arith.constant 0 : index
    %39 = vector.load %arg7[%c0_19, %c0_20] : memref<1x128xf32, #tpu.memory_space<vmem>>, vector<1x128xf32>
    %40 = vector.broadcast %39 : vector<1x128xf32> to vector<16x128xf32>
    %41 = arith.addf %38, %40 : vector<16x128xf32>
    %cst_21 = arith.constant 0.000000e+00 : f32
    %42 = vector.broadcast %cst_21 : f32 to vector<16x128xf32>
    %43 = arith.maximumf %41, %42 : vector<16x128xf32>
    %cst_22 = arith.constant dense<0.000000e+00> : vector<16xf32>
    %44 = vector.multi_reduction <add>, %43, %cst_22 [1] : vector<16x128xf32> to vector<16xf32>
    %45 = vector.shape_cast %44 : vector<16xf32> to vector<16x1xf32>
    %cst_23 = arith.constant 3.125000e-02 : f32
    %46 = vector.broadcast %cst_23 : f32 to vector<16x1xf32>
    %47 = arith.mulf %45, %46 : vector<16x1xf32>
    %48 = tpu.iota {dimensions = array<i32: 1>} : vector<16x128xi32>
    %c32_i32_24 = arith.constant 32 : i32
    %49 = vector.broadcast %c32_i32_24 : i32 to vector<16x128xi32>
    %50 = arith.cmpi slt, %48, %49 : vector<16x128xi32>
    %51 = vector.broadcast %47 : vector<16x1xf32> to vector<16x128xf32>
    %52 = arith.subf %43, %51 : vector<16x128xf32>
    %cst_25 = arith.constant 0.000000e+00 : f32
    %53 = vector.broadcast %cst_25 : f32 to vector<16x128xf32>
    %54 = arith.select %50, %52, %53 : vector<16x128xi1>, vector<16x128xf32>
    %55 = arith.mulf %54, %54 : vector<16x128xf32>
    %cst_26 = arith.constant dense<0.000000e+00> : vector<16xf32>
    %56 = vector.multi_reduction <add>, %55, %cst_26 [1] : vector<16x128xf32> to vector<16xf32>
    %57 = vector.shape_cast %56 : vector<16xf32> to vector<16x1xf32>
    %cst_27 = arith.constant 3.125000e-02 : f32
    %58 = vector.broadcast %cst_27 : f32 to vector<16x1xf32>
    %59 = arith.mulf %57, %58 : vector<16x1xf32>
    %cst_28 = arith.constant 9.99999974E-6 : f32
    %60 = vector.broadcast %cst_28 : f32 to vector<16x1xf32>
    %61 = arith.addf %59, %60 : vector<16x1xf32>
    %62 = math.rsqrt %61 : vector<16x1xf32>
    %63 = vector.broadcast %47 : vector<16x1xf32> to vector<16x128xf32>
    %64 = arith.subf %43, %63 : vector<16x128xf32>
    %65 = vector.broadcast %62 : vector<16x1xf32> to vector<16x128xf32>
    %66 = arith.mulf %64, %65 : vector<16x128xf32>
    %c0_29 = arith.constant 0 : index
    %c0_30 = arith.constant 0 : index
    %67 = vector.load %arg8[%c0_29, %c0_30] : memref<1x128xf32, #tpu.memory_space<vmem>>, vector<1x128xf32>
    %68 = vector.broadcast %67 : vector<1x128xf32> to vector<16x128xf32>
    %69 = arith.mulf %66, %68 : vector<16x128xf32>
    %c0_31 = arith.constant 0 : index
    %c0_32 = arith.constant 0 : index
    %70 = vector.load %arg9[%c0_31, %c0_32] : memref<1x128xf32, #tpu.memory_space<vmem>>, vector<1x128xf32>
    %71 = vector.broadcast %70 : vector<1x128xf32> to vector<16x128xf32>
    %72 = arith.addf %69, %71 : vector<16x128xf32>
    %c0_33 = arith.constant 0 : index
    %c0_34 = arith.constant 0 : index
    %73 = vector.load %arg10[%c0_33, %c0_34] : memref<128x128xf32, #tpu.memory_space<vmem>>, vector<128x128xf32>
    %cst_35 = arith.constant dense<0.000000e+00> : vector<16x128xf32>
    %74 = tpu.matmul %72, %73, %cst_35 {dimension_numbers = #tpu.dot_dimension_numbers<[1], [0], [0], [1], [0, 0, 1, 1], [], []>} : vector<16x128xf32>, vector<128x128xf32>, vector<16x128xf32> -> vector<16x128xf32>
    %c0_36 = arith.constant 0 : index
    %c0_37 = arith.constant 0 : index
    %75 = vector.load %arg11[%c0_36, %c0_37] : memref<1x128xf32, #tpu.memory_space<vmem>>, vector<1x128xf32>
    %76 = vector.broadcast %75 : vector<1x128xf32> to vector<16x128xf32>
    %77 = arith.addf %74, %76 : vector<16x128xf32>
    %c0_38 = arith.constant 0 : index
    %c0_39 = arith.constant 0 : index
    %78 = vector.load %arg12[%c0_38, %c0_39] : memref<16x128xf32, #tpu.memory_space<vmem>>, vector<16x128xf32>
    tpu.vector_store %arg12[%c0_38, %c0_39], %77 {strides = array<i32>} : memref<16x128xf32, #tpu.memory_space<vmem>>, vector<16x128xf32>,
    return
  }
  func.func @transform_0(%arg0: i32) -> (i32, i32) {
    %c0_i32 = arith.constant 0 : i32
    %c0_i32_0 = arith.constant 0 : i32
    return %arg0, %c0_i32 : i32, i32
  }
  func.func @transform_1(%arg0: i32) -> (i32, i32) {
    %c0_i32 = arith.constant 0 : i32
    %c0_i32_0 = arith.constant 0 : i32
    %c0_i32_1 = arith.constant 0 : i32
    return %c0_i32, %c0_i32_0 : i32, i32
  }
  func.func @transform_2(%arg0: i32) -> (i32, i32) {
    %c0_i32 = arith.constant 0 : i32
    %c0_i32_0 = arith.constant 0 : i32
    %c0_i32_1 = arith.constant 0 : i32
    return %c0_i32, %c0_i32_0 : i32, i32
  }
  func.func @transform_3(%arg0: i32) -> (i32, i32) {
    %c0_i32 = arith.constant 0 : i32
    %c0_i32_0 = arith.constant 0 : i32
    %c0_i32_1 = arith.constant 0 : i32
    return %c0_i32, %c0_i32_0 : i32, i32
  }
  func.func @transform_4(%arg0: i32) -> (i32, i32) {
    %c0_i32 = arith.constant 0 : i32
    %c0_i32_0 = arith.constant 0 : i32
    %c0_i32_1 = arith.constant 0 : i32
    return %c0_i32, %c0_i32_0 : i32, i32
  }
  func.func @transform_5(%arg0: i32) -> (i32, i32) {
    %c0_i32 = arith.constant 0 : i32
    %c0_i32_0 = arith.constant 0 : i32
    %c0_i32_1 = arith.constant 0 : i32
    return %c0_i32, %c0_i32_0 : i32, i32
  }
  func.func @transform_6(%arg0: i32) -> (i32, i32) {
    %c0_i32 = arith.constant 0 : i32
    %c0_i32_0 = arith.constant 0 : i32
    %c0_i32_1 = arith.constant 0 : i32
    return %c0_i32, %c0_i32_0 : i32, i32
  }
  func.func @transform_7(%arg0: i32) -> (i32, i32) {
    %c0_i32 = arith.constant 0 : i32
    %c0_i32_0 = arith.constant 0 : i32
    %c0_i32_1 = arith.constant 0 : i32
    return %c0_i32, %c0_i32_0 : i32, i32
  }
  func.func @transform_8(%arg0: i32) -> (i32, i32) {
    %c0_i32 = arith.constant 0 : i32
    %c0_i32_0 = arith.constant 0 : i32
    %c0_i32_1 = arith.constant 0 : i32
    return %c0_i32, %c0_i32_0 : i32, i32
  }
  func.func @transform_9(%arg0: i32) -> (i32, i32) {
    %c0_i32 = arith.constant 0 : i32
    %c0_i32_0 = arith.constant 0 : i32
    %c0_i32_1 = arith.constant 0 : i32
    return %c0_i32, %c0_i32_0 : i32, i32
  }
  func.func @transform_10(%arg0: i32) -> (i32, i32) {
    %c0_i32 = arith.constant 0 : i32
    %c0_i32_0 = arith.constant 0 : i32
    %c0_i32_1 = arith.constant 0 : i32
    return %c0_i32, %c0_i32_0 : i32, i32
  }
  func.func @transform_11(%arg0: i32) -> (i32, i32) {
    %c0_i32 = arith.constant 0 : i32
    %c0_i32_0 = arith.constant 0 : i32
    return %arg0, %c0_i32 : i32, i32
  }
}

</mosaic_0001>

<llo_original>
// kernel: policy_network_forward.1
$region0: #{policy_network_forward.1}
  #allocation0 [shape = 'u32[]', space=smem, size = 0x4, offset = 0x4, fixed_abs, tag = 'smem constant byte address 0x4 - core index']
  #allocation1 [shape = 'u32[144,128]{1,0:T(1,128)}', space=vmem, size = 0x12000, scoped, tag = 'internal scratch']
  %s0 = inlined_call_operand.vmem [shape: f32[16,128], index: 0, kind: input, shape index: {}]
  %s1 = inlined_call_operand.vmem [shape: f32[128,128], index: 1, kind: input, shape index: {}]
  %s2 = inlined_call_operand.vmem [shape: f32[1,128], index: 2, kind: input, shape index: {}]
  %s3 = inlined_call_operand.vmem [shape: f32[1,128], index: 3, kind: input, shape index: {}]
  %s4 = inlined_call_operand.vmem [shape: f32[1,128], index: 4, kind: input, shape index: {}]
  %s5 = inlined_call_operand.vmem [shape: f32[128,128], index: 5, kind: input, shape index: {}]
  %s6 = inlined_call_operand.vmem [shape: f32[1,128], index: 6, kind: input, shape index: {}]
  %s7 = inlined_call_operand.vmem [shape: f32[1,128], index: 7, kind: input, shape index: {}]
  %s8 = inlined_call_operand.vmem [shape: f32[1,128], index: 8, kind: input, shape index: {}]
  %s9 = inlined_call_operand.vmem [shape: f32[128,128], index: 9, kind: input, shape index: {}]
  %s10 = inlined_call_operand.vmem [shape: f32[1,128], index: 10, kind: input, shape index: {}]
  %s11 = inlined_call_operand.vmem [shape: f32[16,128], index: 11, kind: output, shape index: {}]
  %s12 = sld [smem:[#allocation0]]
  $region54: #{policy_network_forward.1} parent=0
    _
  %s14 = ssub.s32 1, %s12
  %s15 = scalar_select 0, %s14, %s12
  // Predicated region
  $region2: #{policy_network_forward.1} parent=0 // pred_check
    _
  $region3: #{policy_network_forward.1} parent=0 // pred_check_branch
    %17 = sbr.rel (0) target = $region5
  $region4: #{policy_network_forward.1} parent=0 // pred_region
    _
  $region5: #{policy_network_forward.1} parent=0 // pred_fallthru
    _
  // Predicated region
  $region6: #{policy_network_forward.1} parent=0 // pred_check
    _
  $region7: #{policy_network_forward.1} parent=0 // pred_check_branch
    %19 = sbr.rel (0) target = $region9
  $region8: #{policy_network_forward.1} parent=0 // pred_region
    _
  $region9: #{policy_network_forward.1} parent=0 // pred_fallthru
    _
  // Predicated region
  $region10: #{policy_network_forward.1} parent=0 // pred_check
    _
  $region11: #{policy_network_forward.1} parent=0 // pred_check_branch
    %21 = sbr.rel (0) target = $region13
  $region12: #{policy_network_forward.1} parent=0 // pred_region
    _
  $region13: #{policy_network_forward.1} parent=0 // pred_fallthru
    _
  // Predicated region
  $region14: #{policy_network_forward.1} parent=0 // pred_check
    _
  $region15: #{policy_network_forward.1} parent=0 // pred_check_branch
    %23 = sbr.rel (0) target = $region17
  $region16: #{policy_network_forward.1} parent=0 // pred_region
    _
  $region17: #{policy_network_forward.1} parent=0 // pred_fallthru
    _
  // Predicated region
  $region18: #{policy_network_forward.1} parent=0 // pred_check
    _
  $region19: #{policy_network_forward.1} parent=0 // pred_check_branch
    %25 = sbr.rel (0) target = $region21
  $region20: #{policy_network_forward.1} parent=0 // pred_region
    _
  $region21: #{policy_network_forward.1} parent=0 // pred_fallthru
    _
  // Predicated region
  $region22: #{policy_network_forward.1} parent=0 // pred_check
    _
  $region23: #{policy_network_forward.1} parent=0 // pred_check_branch
    %27 = sbr.rel (0) target = $region25
  $region24: #{policy_network_forward.1} parent=0 // pred_region
    _
  $region25: #{policy_network_forward.1} parent=0 // pred_fallthru
    _
  // Predicated region
  $region26: #{policy_network_forward.1} parent=0 // pred_check
    _
  $region27: #{policy_network_forward.1} parent=0 // pred_check_branch
    %29 = sbr.rel (0) target = $region29
  $region28: #{policy_network_forward.1} parent=0 // pred_region
    _
  $region29: #{policy_network_forward.1} parent=0 // pred_fallthru
    _
  // Predicated region
  $region30: #{policy_network_forward.1} parent=0 // pred_check
    _
  $region31: #{policy_network_forward.1} parent=0 // pred_check_branch
    %31 = sbr.rel (0) target = $region33
  $region32: #{policy_network_forward.1} parent=0 // pred_region
    _
  $region33: #{policy_network_forward.1} parent=0 // pred_fallthru
    _
  // Predicated region
  $region34: #{policy_network_forward.1} parent=0 // pred_check
    _
  $region35: #{policy_network_forward.1} parent=0 // pred_check_branch
    %33 = sbr.rel (0) target = $region37
  $region36: #{policy_network_forward.1} parent=0 // pred_region
    _
  $region37: #{policy_network_forward.1} parent=0 // pred_fallthru
    _
  // Predicated region
  $region38: #{policy_network_forward.1} parent=0 // pred_check
    _
  $region39: #{policy_network_forward.1} parent=0 // pred_check_branch
    %35 = sbr.rel (0) target = $region41
  $region40: #{policy_network_forward.1} parent=0 // pred_region
    _
  $region41: #{policy_network_forward.1} parent=0 // pred_fallthru
    _
  // Predicated region
  $region42: #{policy_network_forward.1} parent=0 // pred_check
    _
  $region43: #{policy_network_forward.1} parent=0 // pred_check_branch
    %37 = sbr.rel (0) target = $region45
  $region44: #{policy_network_forward.1} parent=0 // pred_region
    _
  $region45: #{policy_network_forward.1} parent=0 // pred_fallthru
    _
  %v38 = vld [vmem:[%s0] sm:$0xff]
  %v39 = vld [vmem:[%s0 + $0x8] sm:$0xff]
  %v40 = vld [vmem:[%s1] sm:$0xff]
  %v41 = vld [vmem:[%s1 + $0x8] sm:$0xff]
  %v42 = vld [vmem:[%s1 + $0x10] sm:$0xff]
  %v43 = vld [vmem:[%s1 + $0x18] sm:$0xff]
  %v44 = vld [vmem:[%s1 + $0x20] sm:$0xff]
  %v45 = vld [vmem:[%s1 + $0x28] sm:$0xff]
  %v46 = vld [vmem:[%s1 + $0x30] sm:$0xff]
  %v47 = vld [vmem:[%s1 + $0x38] sm:$0xff]
  %v48 = vld [vmem:[%s1 + $0x40] sm:$0xff]
  %v49 = vld [vmem:[%s1 + $0x48] sm:$0xff]
  %v50 = vld [vmem:[%s1 + $0x50] sm:$0xff]
  %v51 = vld [vmem:[%s1 + $0x58] sm:$0xff]
  %v52 = vld [vmem:[%s1 + $0x60] sm:$0xff]
  %v53 = vld [vmem:[%s1 + $0x68] sm:$0xff]
  %v54 = vld [vmem:[%s1 + $0x70] sm:$0xff]
  %v55 = vld [vmem:[%s1 + $0x78] sm:$0xff]
  %v56 = vld [vmem:[%s2] sm:$0x1]
  %v58 = vlaneseq
  %v59 = vshrl.u32 %v58, 7
  %v60 = vsub.s32 0, %v59
  %v61 = vrot.slane %v56, %v60
  %63 = vmatprep.subr.mxu0 0.0
  %64 = vmatpush1.msra.mxu0 %v55
  %65 = vmatprep.subr.mxu0 0.0
  %66 = vmatpush1.msra.mxu0 %v54
  %67 = vmatprep.subr.mxu0 0.0
  %68 = vmatpush1.msra.mxu0 %v53
  %69 = vmatprep.subr.mxu0 0.0
  %70 = vmatpush1.msra.mxu0 %v52
  %71 = vmatprep.subr.mxu0 0.0
  %72 = vmatpush1.msra.mxu0 %v51
  %73 = vmatprep.subr.mxu0 0.0
  %74 = vmatpush1.msra.mxu0 %v50
  %75 = vmatprep.subr.mxu0 0.0
  %76 = vmatpush1.msra.mxu0 %v49
  %77 = vmatprep.subr.mxu0 0.0
  %78 = vmatpush1.msra.mxu0 %v48
  %79 = vmatprep.subr.mxu0 0.0
  %80 = vmatpush1.msra.mxu0 %v47
  %81 = vmatprep.subr.mxu0 0.0
  %82 = vmatpush1.msra.mxu0 %v46
  %83 = vmatprep.subr.mxu0 0.0
  %84 = vmatpush1.msra.mxu0 %v45
  %85 = vmatprep.subr.mxu0 0.0
  %86 = vmatpush1.msra.mxu0 %v44
  %87 = vmatprep.subr.mxu0 0.0
  %88 = vmatpush1.msra.mxu0 %v43
  %89 = vmatprep.subr.mxu0 0.0
  %90 = vmatpush1.msra.mxu0 %v42
  %91 = vmatprep.subr.mxu0 0.0
  %92 = vmatpush1.msra.mxu0 %v41
  %93 = vmatprep.subr.mxu0 0.0
  %94 = vmatpush1.msra.mxu0 %v40
  %95 = vmatprep.subr.mxu0 0.0
  %96 = vmatpush2.msra.mxu0 0.0
  %97 = vmatprep.subr.mxu0 0.0
  %98 = vmatpush2.msra.mxu0 0.0
  %99 = vmatprep.subr.mxu0 0.0
  %100 = vmatpush2.msra.mxu0 0.0
  %101 = vmatprep.subr.mxu0 0.0
  %102 = vmatpush2.msra.mxu0 0.0
  %103 = vmatprep.subr.mxu0 0.0
  %104 = vmatpush2.msra.mxu0 0.0
  %105 = vmatprep.subr.mxu0 0.0
  %106 = vmatpush2.msra.mxu0 0.0
  %107 = vmatprep.subr.mxu0 0.0
  %108 = vmatpush2.msra.mxu0 0.0
  %109 = vmatprep.subr.mxu0 0.0
  %110 = vmatpush2.msra.mxu0 0.0
  %111 = vmatprep.subr.mxu0 0.0
  %112 = vmatpush2.msra.mxu0 0.0
  %113 = vmatprep.subr.mxu0 0.0
  %114 = vmatpush2.msra.mxu0 0.0
  %115 = vmatprep.subr.mxu0 0.0
  %116 = vmatpush2.msra.mxu0 0.0
  %117 = vmatprep.subr.mxu0 0.0
  %118 = vmatpush2.msra.mxu0 0.0
  %119 = vmatprep.subr.mxu0 0.0
  %120 = vmatpush2.msra.mxu0 0.0
  %121 = vmatprep.subr.mxu0 0.0
  %122 = vmatpush2.msra.mxu0 0.0
  %123 = vmatprep.subr.mxu0 0.0
  %124 = vmatpush2.msra.mxu0 0.0
  %125 = vmatprep.subr.mxu0 0.0
  %126 = vmatpush2.msra.mxu0 0.0
  %127 = vmatprep.mubr.f32.mxu0 0.0
  %128 = vmatmul.mubr.f32.gmra.mxu0 %v38
  %v129 = vpop.f32.mrf.mxu0
  %v130 = vadd.f32 %v61, %v129
  %v131 = vpop.f32.mrf.mxu0
  %132 = vmatprep.mubr.f32.mxu0 0.0
  %133 = vmatmul.mubr.f32.gmra.mxu0 %v39
  %v134 = vpop.f32.mrf.mxu0
  %v135 = vadd.f32 %v61, %v134
  %v136 = vpop.f32.mrf.mxu0
  %137 = vdwg.mxu0
  %v138 = vmax.f32 %v130, 0.0
  %v139 = vmax.f32 %v135, 0.0
  %140 = vadd.xlane.f32.xlu0 %v138
  %v141 = vpop.xlane.xlu0 %140
  %142 = vadd.xlane.f32.xlu0 %v139
  %v143 = vpop.xlane.xlu0 %142
  %v144 = vmul.f32 %v141, 0.03125
  %v145 = vmul.f32 %v143, 0.03125
  %v146 = vlaneseq
  %v147 = vand.u32 %v146, 127
  %vm148 = vcmp.lt.s32.totalorder %v147, 32
  %v149 = vsub.f32 %v138, %v144
  %v150 = vsub.f32 %v139, %v145
  %v151 = vsel %vm148, %v149, 0.0
  %v152 = vsel %vm148, %v150, 0.0
  %v153 = vmul.f32 %v151, %v151
  %v154 = vmul.f32 %v152, %v152
  %155 = vadd.xlane.f32.xlu0 %v153
  %v156 = vpop.xlane.xlu0 %155
  %157 = vadd.xlane.f32.xlu0 %v154
  %v158 = vpop.xlane.xlu0 %157
  %v159 = vmul.f32 %v156, 0.03125
  %v160 = vmul.f32 %v158, 0.03125
  %v161 = vadd.f32 %v159, 1e-05
  %v162 = vadd.f32 %v160, 1e-05
  %v163 = vrsqrt.pop %v161
  %v164 = vrsqrt.pop %v162
  %v165 = vmul.f32 %v149, %v163
  %v166 = vmul.f32 %v150, %v164
  %v167 = vld [vmem:[%s3] sm:$0x1]
  %v169 = vlaneseq
  %v170 = vshrl.u32 %v169, 7
  %v171 = vsub.s32 0, %v170
  %v172 = vrot.slane %v167, %v171
  %v174 = vmul.f32 %v165, %v172
  %v175 = vmul.f32 %v166, %v172
  %v176 = vld [vmem:[%s4] sm:$0x1]
  %v178 = vlaneseq
  %v179 = vshrl.u32 %v178, 7
  %v180 = vsub.s32 0, %v179
  %v181 = vrot.slane %v176, %v180
  %v183 = vadd.f32 %v174, %v181
  %v184 = vadd.f32 %v175, %v181
  %v185 = vld [vmem:[%s5] sm:$0xff]
  %v186 = vld [vmem:[%s5 + $0x8] sm:$0xff]
  %v187 = vld [vmem:[%s5 + $0x10] sm:$0xff]
  %v188 = vld [vmem:[%s5 + $0x18] sm:$0xff]
  %v189 = vld [vmem:[%s5 + $0x20] sm:$0xff]
  %v190 = vld [vmem:[%s5 + $0x28] sm:$0xff]
  %v191 = vld [vmem:[%s5 + $0x30] sm:$0xff]
  %v192 = vld [vmem:[%s5 + $0x38] sm:$0xff]
  %v193 = vld [vmem:[%s5 + $0x40] sm:$0xff]
  %v194 = vld [vmem:[%s5 + $0x48] sm:$0xff]
  %v195 = vld [vmem:[%s5 + $0x50] sm:$0xff]
  %v196 = vld [vmem:[%s5 + $0x58] sm:$0xff]
  %v197 = vld [vmem:[%s5 + $0x60] sm:$0xff]
  %v198 = vld [vmem:[%s5 + $0x68] sm:$0xff]
  %v199 = vld [vmem:[%s5 + $0x70] sm:$0xff]
  %v200 = vld [vmem:[%s5 + $0x78] sm:$0xff]
  %v201 = vld [vmem:[%s6] sm:$0x1]
  %v203 = vlaneseq
  %v204 = vshrl.u32 %v203, 7
  %v205 = vsub.s32 0, %v204
  %v206 = vrot.slane %v201, %v205
  %208 = vmatprep.subr.mxu0 0.0
  %209 = vmatpush1.msra.mxu0 %v200
  %210 = vmatprep.subr.mxu0 0.0
  %211 = vmatpush1.msra.mxu0 %v199
  %212 = vmatprep.subr.mxu0 0.0
  %213 = vmatpush1.msra.mxu0 %v198
  %214 = vmatprep.subr.mxu0 0.0
  %215 = vmatpush1.msra.mxu0 %v197
  %216 = vmatprep.subr.mxu0 0.0
  %217 = vmatpush1.msra.mxu0 %v196
  %218 = vmatprep.subr.mxu0 0.0
  %219 = vmatpush1.msra.mxu0 %v195
  %220 = vmatprep.subr.mxu0 0.0
  %221 = vmatpush1.msra.mxu0 %v194
  %222 = vmatprep.subr.mxu0 0.0
  %223 = vmatpush1.msra.mxu0 %v193
  %224 = vmatprep.subr.mxu0 0.0
  %225 = vmatpush1.msra.mxu0 %v192
  %226 = vmatprep.subr.mxu0 0.0
  %227 = vmatpush1.msra.mxu0 %v191
  %228 = vmatprep.subr.mxu0 0.0
  %229 = vmatpush1.msra.mxu0 %v190
  %230 = vmatprep.subr.mxu0 0.0
  %231 = vmatpush1.msra.mxu0 %v189
  %232 = vmatprep.subr.mxu0 0.0
  %233 = vmatpush1.msra.mxu0 %v188
  %234 = vmatprep.subr.mxu0 0.0
  %235 = vmatpush1.msra.mxu0 %v187
  %236 = vmatprep.subr.mxu0 0.0
  %237 = vmatpush1.msra.mxu0 %v186
  %238 = vmatprep.subr.mxu0 0.0
  %239 = vmatpush1.msra.mxu0 %v185
  %240 = vmatprep.subr.mxu0 0.0
  %241 = vmatpush2.msra.mxu0 0.0
  %242 = vmatprep.subr.mxu0 0.0
  %243 = vmatpush2.msra.mxu0 0.0
  %244 = vmatprep.subr.mxu0 0.0
  %245 = vmatpush2.msra.mxu0 0.0
  %246 = vmatprep.subr.mxu0 0.0
  %247 = vmatpush2.msra.mxu0 0.0
  %248 = vmatprep.subr.mxu0 0.0
  %249 = vmatpush2.msra.mxu0 0.0
  %250 = vmatprep.subr.mxu0 0.0
  %251 = vmatpush2.msra.mxu0 0.0
  %252 = vmatprep.subr.mxu0 0.0
  %253 = vmatpush2.msra.mxu0 0.0
  %254 = vmatprep.subr.mxu0 0.0
  %255 = vmatpush2.msra.mxu0 0.0
  %256 = vmatprep.subr.mxu0 0.0
  %257 = vmatpush2.msra.mxu0 0.0
  %258 = vmatprep.subr.mxu0 0.0
  %259 = vmatpush2.msra.mxu0 0.0
  %260 = vmatprep.subr.mxu0 0.0
  %261 = vmatpush2.msra.mxu0 0.0
  %262 = vmatprep.subr.mxu0 0.0
  %263 = vmatpush2.msra.mxu0 0.0
  %264 = vmatprep.subr.mxu0 0.0
  %265 = vmatpush2.msra.mxu0 0.0
  %266 = vmatprep.subr.mxu0 0.0
  %267 = vmatpush2.msra.mxu0 0.0
  %268 = vmatprep.subr.mxu0 0.0
  %269 = vmatpush2.msra.mxu0 0.0
  %270 = vmatprep.subr.mxu0 0.0
  %271 = vmatpush2.msra.mxu0 0.0
  %272 = vmatprep.mubr.f32.mxu0 0.0
  %273 = vmatmul.mubr.f32.gmra.mxu0 %v183
  %v274 = vpop.f32.mrf.mxu0
  %v275 = vadd.f32 %v206, %v274
  %v276 = vpop.f32.mrf.mxu0
  %277 = vmatprep.mubr.f32.mxu0 0.0
  %278 = vmatmul.mubr.f32.gmra.mxu0 %v184
  %v279 = vpop.f32.mrf.mxu0
  %v280 = vadd.f32 %v206, %v279
  %v281 = vpop.f32.mrf.mxu0
  %282 = vdwg.mxu0
  %v283 = vmax.f32 %v275, 0.0
  %v284 = vmax.f32 %v280, 0.0
  %285 = vadd.xlane.f32.xlu0 %v283
  %v286 = vpop.xlane.xlu0 %285
  %287 = vadd.xlane.f32.xlu0 %v284
  %v288 = vpop.xlane.xlu0 %287
  %v289 = vmul.f32 %v286, 0.03125
  %v290 = vmul.f32 %v288, 0.03125
  %v291 = vsub.f32 %v283, %v289
  %v292 = vsub.f32 %v284, %v290
  %v293 = vsel %vm148, %v291, 0.0
  %v294 = vsel %vm148, %v292, 0.0
  %v295 = vmul.f32 %v293, %v293
  %v296 = vmul.f32 %v294, %v294
  %297 = vadd.xlane.f32.xlu0 %v295
  %v298 = vpop.xlane.xlu0 %297
  %299 = vadd.xlane.f32.xlu0 %v296
  %v300 = vpop.xlane.xlu0 %299
  %v301 = vmul.f32 %v298, 0.03125
  %v302 = vmul.f32 %v300, 0.03125
  %v303 = vadd.f32 %v301, 1e-05
  %v304 = vadd.f32 %v302, 1e-05
  %v305 = vrsqrt.pop %v303
  %v306 = vrsqrt.pop %v304
  %v307 = vmul.f32 %v291, %v305
  %v308 = vmul.f32 %v292, %v306
  %v309 = vld [vmem:[%s7] sm:$0x1]
  %v311 = vlaneseq
  %v312 = vshrl.u32 %v311, 7
  %v313 = vsub.s32 0, %v312
  %v314 = vrot.slane %v309, %v313
  %v316 = vmul.f32 %v307, %v314
  %v317 = vmul.f32 %v308, %v314
  %v318 = vld [vmem:[%s8] sm:$0x1]
  %v320 = vlaneseq
  %v321 = vshrl.u32 %v320, 7
  %v322 = vsub.s32 0, %v321
  %v323 = vrot.slane %v318, %v322
  %v325 = vadd.f32 %v316, %v323
  %v326 = vadd.f32 %v317, %v323
  %v327 = vld [vmem:[%s9] sm:$0xff]
  %v328 = vld [vmem:[%s9 + $0x8] sm:$0xff]
  %v329 = vld [vmem:[%s9 + $0x10] sm:$0xff]
  %v330 = vld [vmem:[%s9 + $0x18] sm:$0xff]
  %v331 = vld [vmem:[%s9 + $0x20] sm:$0xff]
  %v332 = vld [vmem:[%s9 + $0x28] sm:$0xff]
  %v333 = vld [vmem:[%s9 + $0x30] sm:$0xff]
  %v334 = vld [vmem:[%s9 + $0x38] sm:$0xff]
  %v335 = vld [vmem:[%s9 + $0x40] sm:$0xff]
  %v336 = vld [vmem:[%s9 + $0x48] sm:$0xff]
  %v337 = vld [vmem:[%s9 + $0x50] sm:$0xff]
  %v338 = vld [vmem:[%s9 + $0x58] sm:$0xff]
  %v339 = vld [vmem:[%s9 + $0x60] sm:$0xff]
  %v340 = vld [vmem:[%s9 + $0x68] sm:$0xff]
  %v341 = vld [vmem:[%s9 + $0x70] sm:$0xff]
  %v342 = vld [vmem:[%s9 + $0x78] sm:$0xff]
  %v343 = vld [vmem:[%s10] sm:$0x1]
  %v345 = vlaneseq
  %v346 = vshrl.u32 %v345, 7
  %v347 = vsub.s32 0, %v346
  %v348 = vrot.slane %v343, %v347
  %350 = vmatprep.subr.mxu0 0.0
  %351 = vmatpush1.msra.mxu0 %v342
  %352 = vmatprep.subr.mxu0 0.0
  %353 = vmatpush1.msra.mxu0 %v341
  %354 = vmatprep.subr.mxu0 0.0
  %355 = vmatpush1.msra.mxu0 %v340
  %356 = vmatprep.subr.mxu0 0.0
  %357 = vmatpush1.msra.mxu0 %v339
  %358 = vmatprep.subr.mxu0 0.0
  %359 = vmatpush1.msra.mxu0 %v338
  %360 = vmatprep.subr.mxu0 0.0
  %361 = vmatpush1.msra.mxu0 %v337
  %362 = vmatprep.subr.mxu0 0.0
  %363 = vmatpush1.msra.mxu0 %v336
  %364 = vmatprep.subr.mxu0 0.0
  %365 = vmatpush1.msra.mxu0 %v335
  %366 = vmatprep.subr.mxu0 0.0
  %367 = vmatpush1.msra.mxu0 %v334
  %368 = vmatprep.subr.mxu0 0.0
  %369 = vmatpush1.msra.mxu0 %v333
  %370 = vmatprep.subr.mxu0 0.0
  %371 = vmatpush1.msra.mxu0 %v332
  %372 = vmatprep.subr.mxu0 0.0
  %373 = vmatpush1.msra.mxu0 %v331
  %374 = vmatprep.subr.mxu0 0.0
  %375 = vmatpush1.msra.mxu0 %v330
  %376 = vmatprep.subr.mxu0 0.0
  %377 = vmatpush1.msra.mxu0 %v329
  %378 = vmatprep.subr.mxu0 0.0
  %379 = vmatpush1.msra.mxu0 %v328
  %380 = vmatprep.subr.mxu0 0.0
  %381 = vmatpush1.msra.mxu0 %v327
  %382 = vmatprep.subr.mxu0 0.0
  %383 = vmatpush2.msra.mxu0 0.0
  %384 = vmatprep.subr.mxu0 0.0
  %385 = vmatpush2.msra.mxu0 0.0
  %386 = vmatprep.subr.mxu0 0.0
  %387 = vmatpush2.msra.mxu0 0.0
  %388 = vmatprep.subr.mxu0 0.0
  %389 = vmatpush2.msra.mxu0 0.0
  %390 = vmatprep.subr.mxu0 0.0
  %391 = vmatpush2.msra.mxu0 0.0
  %392 = vmatprep.subr.mxu0 0.0
  %393 = vmatpush2.msra.mxu0 0.0
  %394 = vmatprep.subr.mxu0 0.0
  %395 = vmatpush2.msra.mxu0 0.0
  %396 = vmatprep.subr.mxu0 0.0
  %397 = vmatpush2.msra.mxu0 0.0
  %398 = vmatprep.subr.mxu0 0.0
  %399 = vmatpush2.msra.mxu0 0.0
  %400 = vmatprep.subr.mxu0 0.0
  %401 = vmatpush2.msra.mxu0 0.0
  %402 = vmatprep.subr.mxu0 0.0
  %403 = vmatpush2.msra.mxu0 0.0
  %404 = vmatprep.subr.mxu0 0.0
  %405 = vmatpush2.msra.mxu0 0.0
  %406 = vmatprep.subr.mxu0 0.0
  %407 = vmatpush2.msra.mxu0 0.0
  %408 = vmatprep.subr.mxu0 0.0
  %409 = vmatpush2.msra.mxu0 0.0
  %410 = vmatprep.subr.mxu0 0.0
  %411 = vmatpush2.msra.mxu0 0.0
  %412 = vmatprep.subr.mxu0 0.0
  %413 = vmatpush2.msra.mxu0 0.0
  %414 = vmatprep.mubr.f32.mxu0 0.0
  %415 = vmatmul.mubr.f32.gmra.mxu0 %v325
  %v416 = vpop.f32.mrf.mxu0
  %v417 = vadd.f32 %v348, %v416
  %v418 = vpop.f32.mrf.mxu0
  %419 = vmatprep.mubr.f32.mxu0 0.0
  %420 = vmatmul.mubr.f32.gmra.mxu0 %v326
  %v421 = vpop.f32.mrf.mxu0
  %v422 = vadd.f32 %v348, %v421
  %v423 = vpop.f32.mrf.mxu0
  %424 = vdwg.mxu0
  %425 = vst [vmem:[%s11] sm:$0xff] %v417
  %426 = vst [vmem:[%s11 + $0x8] sm:$0xff] %v422
  // Predicated region
  $region46: #{policy_network_forward.1} parent=0 // pred_check
    _
  $region47: #{policy_network_forward.1} parent=0 // pred_check_branch
    %428 = sbr.rel (0) target = $region49
  $region48: #{policy_network_forward.1} parent=0 // pred_region
    _
  $region49: #{policy_network_forward.1} parent=0 // pred_fallthru
    _
  // Predicated region
  $region50: #{policy_network_forward.1} parent=0 // pred_check
    _
  $region51: #{policy_network_forward.1} parent=0 // pred_check_branch
    %430 = sbr.rel (0) target = $region53
  $region52: #{policy_network_forward.1} parent=0 // pred_region
    _
  $region53: #{policy_network_forward.1} parent=0 // pred_fallthru
    _

</llo_original>
